<compile_context>
chip_gen: v7x
topology: tpu7x:2x2x1
jax: 0.10.0
libtpu: 0.0.40
codegen_flags: <defaults>
</compile_context>

<pallas_src>
import functools

import jax
import jax.numpy as jnp
from jax.experimental import pallas as pl
from jax.experimental.pallas import tpu as pltpu


def _round_up(v, m):
    return ((v + m - 1) // m) * m


def _vmem_capacity_bytes():
    try:
        return int(pltpu.get_tpu_info().vmem_capacity_bytes)
    except Exception:
        return 64 * 1024 * 1024  # conservative fallback: v7x per-TensorCore VMEM


def _sublane(dtype_bytes):
    # Physical second-minor granularity: f32 -> 8 rows, bf16 -> 16, int8 -> 32.
    return 8 * max(1, 4 // max(1, dtype_bytes))


def _choose_hw_tile(hw, c, dtype_bytes, vmem_budget_bytes):
    """Spatial tile (multiple of 128 lanes) whose double-buffered x+mask slab fits the
    budget, accounting for sublane padding of the (1,C,T) x block and the (1,1,T) mask."""
    sub = _sublane(dtype_bytes)
    rows = _round_up(c, sub) + sub                 # padded x rows + padded mask rows
    per_lane = 2 * rows * dtype_bytes              # x2: double-buffered pipeline
    max_lanes = max(512, (vmem_budget_bytes // per_lane // 128) * 128)
    return max(128, min(max_lanes, _round_up(hw, 128)))


def _block_diag(mats):
    rows = sum(int(m.shape[0]) for m in mats)
    cols = sum(int(m.shape[1]) for m in mats)
    out = jnp.zeros((rows, cols), jnp.float32)
    r = c = 0
    for m in mats:
        out = out.at[r:r + m.shape[0], c:c + m.shape[1]].set(m.astype(jnp.float32))
        r += int(m.shape[0])
        c += int(m.shape[1])
    return out


# --------------------------------------------------------------------------------------
# Kernel 1: fused masked-pool + all heads, grid = (B "parallel", K spatial "arbitrary")
# --------------------------------------------------------------------------------------
def _combined_feature_kernel(x_ref, m_ref, wa_ref, ba_ref, ws_ref, bs_ref,
                             out_ref, acc_x_ref, acc_m_ref):
    k = pl.program_id(1)

    @pl.when(k == 0)
    def _init():
        acc_x_ref[...] = jnp.zeros_like(acc_x_ref)
        acc_m_ref[...] = jnp.zeros_like(acc_m_ref)

    # Masked partial sums for this spatial tile. Multiply in the input dtype
    # (saves VPU work on v6e/v7x bf16; on v5e it upcasts anyway), accumulate in f32.
    x = x_ref[...]                                               # [1, C, T]
    m = m_ref[...]                                               # [1, 1, T]
    w = (x * m).astype(jnp.float32)
    acc_x_ref[...] += jnp.sum(w, axis=-1)                        # [1, C]
    acc_m_ref[...] += jnp.sum(m.astype(jnp.float32), axis=-1)    # [1, 1]

    @pl.when(k == pl.num_programs(1) - 1)
    def _finalize():
        # Exact divide (matches the torch reference's eps-divide; once per row -> free).
        pooled = acc_x_ref[...] / (acc_m_ref[...] + 1e-6)                    # [1, C]
        alpha = jnp.tanh(
            jnp.dot(pooled, wa_ref[...], preferred_element_type=jnp.float32)
            + ba_ref[...])                                                   # [1, sumA]
        style = (jnp.dot(alpha, ws_ref[...], preferred_element_type=jnp.float32)
                 + bs_ref[...])                                              # [1, S_pad]
        out_ref[...] = style[None].astype(out_ref.dtype)                     # [1, 1, S_pad]


@functools.partial(jax.jit, static_argnames=("hw_tile", "vmem_limit_bytes"))
def _combined_forward(x_flat, m_flat, wa, ba, ws_pad, bs_pad, *, hw_tile, vmem_limit_bytes):
    B, C, HW = x_flat.shape
    sumA = wa.shape[1]
    S_pad = ws_pad.shape[1]
    K = HW // hw_tile
    itemsize = x_flat.dtype.itemsize
    w_bytes = sum(int(a.size) * a.dtype.itemsize for a in (wa, ba, ws_pad, bs_pad))
    cost = pl.CostEstimate(
        flops=2 * B * (C * HW + C * sumA + sumA * S_pad),
        transcendentals=B * sumA,
        bytes_accessed=B * (C + 1) * HW * itemsize + w_bytes + B * S_pad * 4,
    )

    out = pl.pallas_call(
        _combined_feature_kernel,
        out_shape=jax.ShapeDtypeStruct((B, 1, S_pad), jnp.float32),
        grid_spec=pltpu.PrefetchScalarGridSpec(
            num_scalar_prefetch=0,
            grid=(B, K),
            in_specs=[
                # x: one (C, hw_tile) spatial slab per step (double-buffered DMA stream)
                pl.BlockSpec((1, C, hw_tile), lambda b, k: (b, 0, k)),
                # mask slab in the same (x) dtype -> minimal extra HBM bytes
                pl.BlockSpec((1, 1, hw_tile), lambda b, k: (b, 0, k)),
                # fused head weights: constant block index -> resident after first fetch
                pl.BlockSpec(wa.shape, lambda b, k: (0, 0)),
                pl.BlockSpec(ba.shape, lambda b, k: (0, 0)),
                pl.BlockSpec(ws_pad.shape, lambda b, k: (0, 0)),
                pl.BlockSpec(bs_pad.shape, lambda b, k: (0, 0)),
            ],
            # lane-dense 128-padded output slab, one row per batch element
            out_specs=pl.BlockSpec((1, 1, S_pad), lambda b, k: (b, 0, 0)),
            scratch_shapes=[
                pltpu.VMEM((1, C), jnp.float32),   # masked partial-sum accumulator
                pltpu.VMEM((1, 1), jnp.float32),   # mask-count accumulator
            ],
        ),
        compiler_params=pltpu.CompilerParams(
            dimension_semantics=("parallel", "arbitrary"),
            vmem_limit_bytes=vmem_limit_bytes,
        ),
        cost_estimate=cost,
    )(x_flat, m_flat, wa, ba, ws_pad, bs_pad)
    return out[:, 0, :]


# --------------------------------------------------------------------------------------
# Kernel 2 (B == 1): split the spatial reduction across a leading "parallel" axis so both
# v7x TensorCores stream HBM; heads are applied in a tiny plain-JAX epilogue.
# --------------------------------------------------------------------------------------
def _partial_pool_kernel(x_ref, m_ref, sum_ref, cnt_ref):
    k = pl.program_id(1)

    @pl.when(k == 0)
    def _init():
        sum_ref[...] = jnp.zeros_like(sum_ref)
        cnt_ref[...] = jnp.zeros_like(cnt_ref)

    x = x_ref[...]                                               # [1, C, T]
    m = m_ref[...]                                               # [1, 1, T]
    w = (x * m).astype(jnp.float32)
    sum_ref[...] += jnp.sum(w, axis=-1)[:, None, :]              # [1, 1, C]
    cnt_ref[...] += jnp.sum(m.astype(jnp.float32), axis=-1)[:, None, :]   # [1, 1, 1]


@functools.partial(jax.jit, static_argnames=("hw_tile", "n_split", "vmem_limit_bytes"))
def _split_pooled_forward(x_flat, m_flat, wa, ba, ws_pad, bs_pad,
                          *, hw_tile, n_split, vmem_limit_bytes):
    B, C, HW = x_flat.shape
    kp = HW // (hw_tile * n_split)
    itemsize = x_flat.dtype.itemsize
    cost = pl.CostEstimate(
        flops=2 * B * C * HW,
        transcendentals=0,
        bytes_accessed=B * (C + 1) * HW * itemsize + n_split * (C + 1) * 4,
    )

    sums, cnts = pl.pallas_call(
        _partial_pool_kernel,
        out_shape=(jax.ShapeDtypeStruct((n_split, 1, C), jnp.float32),
                   jax.ShapeDtypeStruct((n_split, 1, 1), jnp.float32)),
        grid_spec=pltpu.PrefetchScalarGridSpec(
            num_scalar_prefetch=0,
            grid=(n_split, kp),
            in_specs=[
                pl.BlockSpec((1, C, hw_tile), lambda s, k: (0, 0, s * kp + k)),
                pl.BlockSpec((1, 1, hw_tile), lambda s, k: (0, 0, s * kp + k)),
            ],
            out_specs=(pl.BlockSpec((1, 1, C), lambda s, k: (s, 0, 0)),
                       pl.BlockSpec((1, 1, 1), lambda s, k: (s, 0, 0))),
        ),
        compiler_params=pltpu.CompilerParams(
            dimension_semantics=("parallel", "arbitrary"),
            vmem_limit_bytes=vmem_limit_bytes,
        ),
        cost_estimate=cost,
    )(x_flat, m_flat)

    pooled = sums.sum(axis=0) / (cnts.sum(axis=0) + 1e-6)        # [1, C]
    alpha = jnp.tanh(pooled @ wa + ba)                           # [1, sumA]
    return alpha @ ws_pad + bs_pad                               # [1, S_pad]


# --------------------------------------------------------------------------------------
# Wrapper class
# --------------------------------------------------------------------------------------
class CombinedFeaturePallas:
    """JAX/Pallas port of CombinedFeature: all per-feature style heads fused in one kernel."""

    def __init__(self, feature_params, hw_tile=None):
        # feature_params: list of (W_a [C,A_i], b_a [1,A_i], W_s [A_i,S_i], b_s [1,S_i])
        self.feature_params = feature_params
        self.alpha_dim = sum(int(p[0].shape[1]) for p in feature_params)
        self.style_token_dim = sum(int(p[2].shape[1]) for p in feature_params)
        self._hw_tile = hw_tile

        # Fuse heads: column-concat of alpha heads, block-diagonal of style heads
        # (exactly equivalent to per-feature forward + torch.cat(..., dim=1)).
        wa_cat = jnp.concatenate([p[0] for p in feature_params], axis=1)
        ba_cat = jnp.concatenate([p[1] for p in feature_params], axis=1)
        ws_bd = _block_diag([p[2] for p in feature_params])
        bs_cat = jnp.concatenate([p[3] for p in feature_params], axis=1)

        # Zero-pad the style dim to a multiple of 128 so the store is lane-dense (unmasked vst).
        s_pad = _round_up(self.style_token_dim, 128)
        pad = s_pad - self.style_token_dim
        self._wa = wa_cat.astype(jnp.float32)
        self._ba = ba_cat.astype(jnp.float32)
        self._ws = jnp.pad(ws_bd, ((0, 0), (0, pad)))
        self._bs = jnp.pad(bs_cat.astype(jnp.float32), ((0, 0), (0, pad)))

    def __call__(self, x, m):
        # x: [B, C, H, W] (NCHW), m: [B, 1, H, W]
        B, C, H, W = x.shape
        HW = H * W
        x_flat = x.reshape(B, C, HW)
        # Mask streamed in x's dtype -> cuts HBM bytes (kernel is bandwidth-bound);
        # the kernel upcasts only the accumulators to f32.
        m_flat = m.reshape(B, 1, HW).astype(x.dtype)

        # Generation-aware VMEM bookkeeping (128 MiB v5e/v6e vs 64 MiB per-TC v7x),
        # with 2x weight buffering (constant-index specs are still double-buffered).
        vmem_cap = _vmem_capacity_bytes()
        w_bytes = sum(int(a.size) * a.dtype.itemsize
                      for a in (self._wa, self._ba, self._ws, self._bs))
        tile_budget = max(2 * 1024 * 1024, vmem_cap // 8 - 2 * w_bytes)
        vmem_limit = int(vmem_cap // 2)

        hw_tile = self._hw_tile or _choose_hw_tile(HW, C, x.dtype.itemsize, tile_budget)
        hw_tile = max(128, (hw_tile // 128) * 128)

        # B == 1: split spatial reduction across 2 "parallel" slices (fills both v7x cores).
        n_split = 2 if B == 1 else 1

        # Zero-pad HW to a multiple of the tile: zeros in the mask keep the pooled
        # average exact while guaranteeing an exact, >=128-lane tiled reduction grid.
        hw_pad = _round_up(HW, hw_tile * n_split)
        if hw_pad != HW:
            pad = hw_pad - HW
            x_flat = jnp.pad(x_flat, ((0, 0), (0, 0), (0, pad)))
            m_flat = jnp.pad(m_flat, ((0, 0), (0, 0), (0, pad)))

        if n_split == 1:
            out = _combined_forward(x_flat, m_flat, self._wa, self._ba, self._ws, self._bs,
                                    hw_tile=hw_tile, vmem_limit_bytes=vmem_limit)
        else:
            out = _split_pooled_forward(x_flat, m_flat, self._wa, self._ba, self._ws,
                                        self._bs, hw_tile=hw_tile, n_split=n_split,
                                        vmem_limit_bytes=vmem_limit)
        return out[:, : self.style_token_dim]


# --------------------------------------------------------------------------------------
# Synthetic sub-feature params + plain-JAX reference
# --------------------------------------------------------------------------------------
def _make_feature_params(key, c_in, alpha_dim, style_dim):
    k1, k2, k3, k4 = jax.random.split(key, 4)
    wa = jax.random.normal(k1, (c_in, alpha_dim), jnp.float32) * 0.1
    ba = jax.random.normal(k2, (1, alpha_dim), jnp.float32) * 0.01
    ws = jax.random.normal(k3, (alpha_dim, style_dim), jnp.float32) * 0.1
    bs = jax.random.normal(k4, (1, style_dim), jnp.float32) * 0.01
    return (wa, ba, ws, bs)


def _reference_forward(x, m, feature_params):
    """Plain-JAX reference (per-feature forward + concat), for validation."""
    B, C, H, W = x.shape
    xf = x.reshape(B, C, H * W).astype(jnp.float32)
    mf = m.reshape(B, 1, H * W).astype(jnp.float32)
    pooled = (xf * mf).sum(-1) / (mf.sum(-1) + 1e-6)   # [B, C]
    outs = []
    for wa, ba, ws, bs in feature_params:
        alpha = jnp.tanh(pooled @ wa + ba)
        outs.append(alpha @ ws + bs)
    return jnp.concatenate(outs, axis=1)


if __name__ == "__main__":
    key = jax.random.PRNGKey(0)
    k_x, k_m, k_f0, k_f1 = jax.random.split(key, 4)

    B, C, H, W = 2, 4, 16, 16
    x = jax.random.normal(k_x, (B, C, H, W), jnp.float32)               # NCHW
    m = (jax.random.uniform(k_m, (B, 1, H, W)) > 0.3).astype(jnp.float32)

    # two sub-features: (alpha_dim=8, style=16) and (alpha_dim=4, style=8)
    params = [
        _make_feature_params(k_f0, C, 8, 16),
        _make_feature_params(k_f1, C, 4, 8),
    ]
    # hw_tile=128 forces a 2-step spatial reduction grid (exercises accumulate/finalize)
    model = CombinedFeaturePallas(params, hw_tile=128)

    out = jax.block_until_ready(model(x, m))
    assert out.shape == (B, model.style_token_dim), out.shape
    assert bool(jnp.all(jnp.isfinite(out)))
    ref = _reference_forward(x, m, params)
    assert jnp.allclose(out, ref, atol=1e-3, rtol=1e-3), float(jnp.max(jnp.abs(out - ref)))

    # B == 1 path: spatial reduction split across a "parallel" axis, heads in JAX epilogue
    out1 = jax.block_until_ready(model(x[:1], m[:1]))
    ref1 = _reference_forward(x[:1], m[:1], params)
    assert out1.shape == (1, model.style_token_dim), out1.shape
    assert jnp.allclose(out1, ref1, atol=1e-3, rtol=1e-3), float(jnp.max(jnp.abs(out1 - ref1)))

    print("KERNEL_OK")
</pallas_src>

<mosaic_0001>
module attributes {stable_mosaic.version = 11 : i64} {
  func.func @_combined_feature_kernel(%arg0: i32, %arg1: i32, %arg2: memref<1x4x128xf32, #tpu.memory_space<vmem>>, %arg3: memref<1x1x128xf32, #tpu.memory_space<vmem>>, %arg4: memref<4x12xf32, #tpu.memory_space<vmem>>, %arg5: memref<1x12xf32, #tpu.memory_space<vmem>>, %arg6: memref<12x128xf32, #tpu.memory_space<vmem>>, %arg7: memref<1x128xf32, #tpu.memory_space<vmem>>, %arg8: memref<1x1x128xf32, #tpu.memory_space<vmem>>, %arg9: memref<1x4xf32, #tpu.memory_space<vmem>>, %arg10: memref<1x1xf32, #tpu.memory_space<vmem>>) attributes {dimension_semantics = [#tpu.dimension_semantics<parallel>, #tpu.dimension_semantics<arbitrary>], iteration_bounds = array<i64: 2, 2>, scalar_prefetch = 0 : i64, scratch_operands = 2 : i64, tpu.core_type = #tpu.core_type<tc>, window_params = [{transform_indices = @transform_0, window_bounds = array<i64: 1, 4, 128>}, {transform_indices = @transform_1, window_bounds = array<i64: 1, 1, 128>}, {pipeline_mode = #tpu.pipeline_mode<synchronous>, transform_indices = @transform_2, window_bounds = array<i64: 4, 12>}, {pipeline_mode = #tpu.pipeline_mode<synchronous>, transform_indices = @transform_3, window_bounds = array<i64: 1, 12>}, {pipeline_mode = #tpu.pipeline_mode<synchronous>, transform_indices = @transform_4, window_bounds = array<i64: 12, 128>}, {pipeline_mode = #tpu.pipeline_mode<synchronous>, transform_indices = @transform_5, window_bounds = array<i64: 1, 128>}, {transform_indices = @transform_6, window_bounds = array<i64: 1, 1, 128>}]} {
    %c0_i32 = arith.constant 0 : i32
    %0 = arith.cmpi eq, %arg1, %c0_i32 : i32
    %1 = arith.extui %0 : i1 to i32
    %c0_i32_0 = arith.constant 0 : i32
    %2 = arith.cmpi ne, %1, %c0_i32_0 : i32
    scf.if %2 {
      %cst_16 = arith.constant 0.000000e+00 : f32
      %18 = vector.broadcast %cst_16 : f32 to vector<1x4xf32>
      %c0_17 = arith.constant 0 : index
      %c0_18 = arith.constant 0 : index
      %19 = vector.load %arg9[%c0_17, %c0_18] : memref<1x4xf32, #tpu.memory_space<vmem>>, vector<1x4xf32>
      tpu.vector_store %arg9[%c0_17, %c0_18], %18 {strides = array<i32>} : memref<1x4xf32, #tpu.memory_space<vmem>>, vector<1x4xf32>,
      %cst_19 = arith.constant 0.000000e+00 : f32
      %20 = vector.broadcast %cst_19 : f32 to vector<1x1xf32>
      %c0_20 = arith.constant 0 : index
      %c0_21 = arith.constant 0 : index
      %21 = vector.load %arg10[%c0_20, %c0_21] : memref<1x1xf32, #tpu.memory_space<vmem>>, vector<1x1xf32>
      tpu.vector_store %arg10[%c0_20, %c0_21], %20 {strides = array<i32>} : memref<1x1xf32, #tpu.memory_space<vmem>>, vector<1x1xf32>,
    } else {
    }
    %c0 = arith.constant 0 : index
    %c0_1 = arith.constant 0 : index
    %c0_2 = arith.constant 0 : index
    %3 = vector.load %arg2[%c0, %c0_1, %c0_2] : memref<1x4x128xf32, #tpu.memory_space<vmem>>, vector<1x4x128xf32>
    %c0_3 = arith.constant 0 : index
    %c0_4 = arith.constant 0 : index
    %c0_5 = arith.constant 0 : index
    %4 = vector.load %arg3[%c0_3, %c0_4, %c0_5] : memref<1x1x128xf32, #tpu.memory_space<vmem>>, vector<1x1x128xf32>
    %5 = vector.broadcast %4 : vector<1x1x128xf32> to vector<1x4x128xf32>
    %6 = arith.mulf %3, %5 : vector<1x4x128xf32>
    %c0_6 = arith.constant 0 : index
    %c0_7 = arith.constant 0 : index
    %7 = vector.load %arg9[%c0_6, %c0_7] : memref<1x4xf32, #tpu.memory_space<vmem>>, vector<1x4xf32>
    %cst = arith.constant dense<0.000000e+00> : vector<1x4xf32>
    %8 = vector.multi_reduction <add>, %6, %cst [2] : vector<1x4x128xf32> to vector<1x4xf32>
    %9 = arith.addf %7, %8 : vector<1x4xf32>
    %c0_8 = arith.constant 0 : index
    %c0_9 = arith.constant 0 : index
    %10 = vector.load %arg9[%c0_8, %c0_9] : memref<1x4xf32, #tpu.memory_space<vmem>>, vector<1x4xf32>
    tpu.vector_store %arg9[%c0_8, %c0_9], %9 {strides = array<i32>} : memref<1x4xf32, #tpu.memory_space<vmem>>, vector<1x4xf32>,
    %c0_10 = arith.constant 0 : index
    %c0_11 = arith.constant 0 : index
    %11 = vector.load %arg10[%c0_10, %c0_11] : memref<1x1xf32, #tpu.memory_space<vmem>>, vector<1x1xf32>
    %cst_12 = arith.constant dense<0.000000e+00> : vector<1x1xf32>
    %12 = vector.multi_reduction <add>, %4, %cst_12 [2] : vector<1x1x128xf32> to vector<1x1xf32>
    %13 = arith.addf %11, %12 : vector<1x1xf32>
    %c0_13 = arith.constant 0 : index
    %c0_14 = arith.constant 0 : index
    %14 = vector.load %arg10[%c0_13, %c0_14] : memref<1x1xf32, #tpu.memory_space<vmem>>, vector<1x1xf32>
    tpu.vector_store %arg10[%c0_13, %c0_14], %13 {strides = array<i32>} : memref<1x1xf32, #tpu.memory_space<vmem>>, vector<1x1xf32>,
    %c1_i32 = arith.constant 1 : i32
    %15 = arith.cmpi eq, %arg1, %c1_i32 : i32
    %16 = arith.extui %15 : i1 to i32
    %c0_i32_15 = arith.constant 0 : i32
    %17 = arith.cmpi ne, %16, %c0_i32_15 : i32
    scf.if %17 {
      %c0_16 = arith.constant 0 : index
      %c0_17 = arith.constant 0 : index
      %18 = vector.load %arg9[%c0_16, %c0_17] : memref<1x4xf32, #tpu.memory_space<vmem>>, vector<1x4xf32>
      %c0_18 = arith.constant 0 : index
      %c0_19 = arith.constant 0 : index
      %19 = vector.load %arg10[%c0_18, %c0_19] : memref<1x1xf32, #tpu.memory_space<vmem>>, vector<1x1xf32>
      %cst_20 = arith.constant 9.99999997E-7 : f32
      %20 = vector.broadcast %cst_20 : f32 to vector<1x1xf32>
      %21 = arith.addf %19, %20 : vector<1x1xf32>
      %22 = vector.broadcast %21 : vector<1x1xf32> to vector<1x4xf32>
      %23 = arith.divf %18, %22 : vector<1x4xf32>
      %c0_21 = arith.constant 0 : index
      %c0_22 = arith.constant 0 : index
      %24 = vector.load %arg4[%c0_21, %c0_22] : memref<4x12xf32, #tpu.memory_space<vmem>>, vector<4x12xf32>
      %cst_23 = arith.constant dense<0.000000e+00> : vector<1x12xf32>
      %25 = tpu.matmul %23, %24, %cst_23 {dimension_numbers = #tpu.dot_dimension_numbers<[1], [0], [0], [1], [0, 0, 1, 1], [], []>} : vector<1x4xf32>, vector<4x12xf32>, vector<1x12xf32> -> vector<1x12xf32>
      %c0_24 = arith.constant 0 : index
      %c0_25 = arith.constant 0 : index
      %26 = vector.load %arg5[%c0_24, %c0_25] : memref<1x12xf32, #tpu.memory_space<vmem>>, vector<1x12xf32>
      %27 = arith.addf %25, %26 : vector<1x12xf32>
      %28 = math.tanh %27 : vector<1x12xf32>
      %c0_26 = arith.constant 0 : index
      %c0_27 = arith.constant 0 : index
      %29 = vector.load %arg6[%c0_26, %c0_27] : memref<12x128xf32, #tpu.memory_space<vmem>>, vector<12x128xf32>
      %cst_28 = arith.constant dense<0.000000e+00> : vector<1x128xf32>
      %30 = tpu.matmul %28, %29, %cst_28 {dimension_numbers = #tpu.dot_dimension_numbers<[1], [0], [0], [1], [0, 0, 1, 1], [], []>} : vector<1x12xf32>, vector<12x128xf32>, vector<1x128xf32> -> vector<1x128xf32>
      %c0_29 = arith.constant 0 : index
      %c0_30 = arith.constant 0 : index
      %31 = vector.load %arg7[%c0_29, %c0_30] : memref<1x128xf32, #tpu.memory_space<vmem>>, vector<1x128xf32>
      %32 = arith.addf %30, %31 : vector<1x128xf32>
      %33 = vector.shape_cast %32 : vector<1x128xf32> to vector<1x1x128xf32>
      %c0_31 = arith.constant 0 : index
      %c0_32 = arith.constant 0 : index
      %c0_33 = arith.constant 0 : index
      %34 = vector.load %arg8[%c0_31, %c0_32, %c0_33] : memref<1x1x128xf32, #tpu.memory_space<vmem>>, vector<1x1x128xf32>
      tpu.vector_store %arg8[%c0_31, %c0_32, %c0_33], %33 {strides = array<i32>} : memref<1x1x128xf32, #tpu.memory_space<vmem>>, vector<1x1x128xf32>,
    } else {
    }
    return
  }
  func.func @transform_0(%arg0: i32, %arg1: i32) -> (i32, i32, i32) {
    %c0_i32 = arith.constant 0 : i32
    %c0_i32_0 = arith.constant 0 : i32
    return %arg0, %c0_i32, %arg1 : i32, i32, i32
  }
  func.func @transform_1(%arg0: i32, %arg1: i32) -> (i32, i32, i32) {
    %c0_i32 = arith.constant 0 : i32
    %c0_i32_0 = arith.constant 0 : i32
    return %arg0, %c0_i32, %arg1 : i32, i32, i32
  }
  func.func @transform_2(%arg0: i32, %arg1: i32) -> (i32, i32) {
    %c0_i32 = arith.constant 0 : i32
    %c0_i32_0 = arith.constant 0 : i32
    %c0_i32_1 = arith.constant 0 : i32
    return %c0_i32, %c0_i32_0 : i32, i32
  }
  func.func @transform_3(%arg0: i32, %arg1: i32) -> (i32, i32) {
    %c0_i32 = arith.constant 0 : i32
    %c0_i32_0 = arith.constant 0 : i32
    %c0_i32_1 = arith.constant 0 : i32
    return %c0_i32, %c0_i32_0 : i32, i32
  }
  func.func @transform_4(%arg0: i32, %arg1: i32) -> (i32, i32) {
    %c0_i32 = arith.constant 0 : i32
    %c0_i32_0 = arith.constant 0 : i32
    %c0_i32_1 = arith.constant 0 : i32
    return %c0_i32, %c0_i32_0 : i32, i32
  }
  func.func @transform_5(%arg0: i32, %arg1: i32) -> (i32, i32) {
    %c0_i32 = arith.constant 0 : i32
    %c0_i32_0 = arith.constant 0 : i32
    %c0_i32_1 = arith.constant 0 : i32
    return %c0_i32, %c0_i32_0 : i32, i32
  }
  func.func @transform_6(%arg0: i32, %arg1: i32) -> (i32, i32, i32) {
    %c0_i32 = arith.constant 0 : i32
    %c0_i32_0 = arith.constant 0 : i32
    %c0_i32_1 = arith.constant 0 : i32
    return %arg0, %c0_i32, %c0_i32_0 : i32, i32, i32
  }
}

</mosaic_0001>

<llo_original>
// kernel: _combined_forward.1
$region0: #{_combined_forward.1}
  #allocation0 [shape = 'u32[]', space=smem, size = 0x4, offset = 0x4, fixed_abs, tag = 'smem constant byte address 0x4 - core index']
  #allocation1 [shape = 'u32[144,128]{1,0:T(1,128)}', space=vmem, size = 0x12000, scoped, tag = 'internal scratch']
  #allocation2 [shape = 'f32[1,4]{1,0:T(1,128)}', space=vmem, size = 0x200, scoped, tag = 'scratch operand']
  #allocation3 [shape = 'f32[1,1]{1,0:T(1,128)}', space=vmem, size = 0x200, scoped, tag = 'scratch operand']
  %s0 = inlined_call_operand.hbm [shape: f32[2,4,256], index: 0, kind: input, shape index: {}]
  %s1 = inlined_call_operand.hbm [shape: f32[2,1,256], index: 1, kind: input, shape index: {}]
  %s2 = inlined_call_operand.vmem [shape: f32[4,12], index: 2, kind: input, shape index: {}]
  %s3 = inlined_call_operand.vmem [shape: f32[1,12], index: 3, kind: input, shape index: {}]
  %s4 = inlined_call_operand.hbm [shape: f32[12,128], index: 4, kind: input, shape index: {}]
  %s5 = inlined_call_operand.vmem [shape: f32[1,128], index: 5, kind: input, shape index: {}]
  %s6 = inlined_call_operand.hbm [shape: f32[2,1,128], index: 6, kind: output, shape index: {}]
  %s7 = sld [smem:[#allocation0]]
  $region77: #{_combined_forward.1} parent=0
    _
  %s9 = ssub.s32 1, %s7
  %s10 = scalar_select 0, %s9, %s7
  $region1: #{_combined_forward.1} parent=0
    #allocation4 [shape = 'u8[4096]{0}', space=vmem, size = 0x1000, scoped, tag = 'input window, operand 0']
    #allocation5 [shape = 's32[2]{0}', space=sflag, size = 0x8, scoped, tag = 'scoped memory for _combined_forward.1']
    #allocation6 [shape = 's32[2]{0}', space=sflag, size = 0x8, scoped, tag = 'scoped memory for _combined_forward.1']
    #allocation7 [shape = 'u8[1024]{0}', space=vmem, size = 0x400, scoped, tag = 'input window, operand 1']
    #allocation8 [shape = 's32[2]{0}', space=sflag, size = 0x8, scoped, tag = 'scoped memory for _combined_forward.1']
    #allocation9 [shape = 'u8[8192]{0}', space=vmem, size = 0x2000, scoped, tag = 'input window, operand 4, single buffered']
    #allocation10 [shape = 'u8[1024]{0}', space=vmem, size = 0x400, scoped, tag = 'output window, operand 0']
    %11 = vsyncpa [#allocation5], 0
    %s12 = scalar_lea.sflag [#allocation5], 1
    %13 = vsyncpa %s12, 0
    %14 = vsyncpa [#allocation8], 0
    %s15 = scalar_lea.sflag [#allocation8], 1
    %16 = vsyncpa %s15, 0
    %17 = vsyncpa [#allocation6], 0
    %s18 = scalar_lea.sflag [#allocation6], 1
    %19 = vsyncpa %s18, 0
    loop: start=0, step=1, limit=6
    $region2: #{_combined_forward.1} parent=1 // loop_pre_header
      _
    $region3: #{_combined_forward.1} parent=1 // loop_header
      %s21 = sphi 0, %s25
      %p22 = scmp.ge.s32.totalorder %s21, 6
      %s28 = sphi 0, %s40
      %s29 = sphi 0, %s36
      %s30 = sphi 0, %s28
      %s31 = sphi 0, %s29
      %s32 = sphi 0, %s30
      %s33 = sphi 0, %s31
      %s45 = sphi 0, %s47
      %s48 = sphi 0, %s45
      %s49 = sphi 0, %s48
      %s65 = sphi 0, %s49
      %s73 = sphi 0, %s75
      %s76 = sphi 0, %s73
      %s77 = sphi 0, %s76
      %s93 = sphi 0, %s77
      %s97 = sphi 0, %s97
      %s99 = sphi 0, %s97
      %s100 = sphi 0, %s99
      %s114 = sphi 0, %s100
      %s118 = sphi 0, %s118
      %s120 = sphi 0, %s118
      %s121 = sphi 0, %s120
      %s135 = sphi 0, %s121
      %s139 = sphi 0, %s139
      %s141 = sphi 0, %s139
      %s142 = sphi 0, %s141
      %s156 = sphi 0, %s142
      %s160 = sphi 0, %s160
      %s162 = sphi 0, %s160
      %s163 = sphi 0, %s162
      %s177 = sphi 0, %s163
      %s183 = sphi 0, %s185
      %s186 = sphi 0, %s183
      %s187 = sphi 0, %s186
      %s203 = sphi 0, %s187
    $region4: #{_combined_forward.1} parent=1 // loop_header_branch
      %24 = sbr.rel (%p22) target = $region8
    $region5: #{_combined_forward.1} parent=1 // loop_body
      %s26 = ssub.s32 %s21, 1
      %s27 = ssub.s32 %s21, 2
      %s34 = sadd.s32 1, %s29
      %p35 = scmp.ge.s32.totalorder %s34, 2
      %s36 = scalar_select %p35, 0, %s34
      %s37 = sadd.s32 1, %s28
      %s38 = scalar_select %p35, %s37, %s28
      %p39 = scmp.ge.s32.totalorder %s38, 2
      %s40 = scalar_select %p39, 0, %s38
      %s41 = ssub.s32 %s28, %s40
      %s42 = ssub.s32 %s29, %s36
      %s43 = sor.u32 %s41, %s42
      %p44 = scmp.eq.s32.totalorder %s43, 0
      %s46 = sadd.s32 %s45, 1
      %s47 = scalar_select %p44, %s45, %s46
      %p50 = pneg %p44
      %p51 = scmp.eq.s32.totalorder %s21, 3
      %p52 = por %p50, %p51
      %p53 = scmp.ne.s32.totalorder %s45, %s48
      %p54 = scmp.eq.s32.totalorder %s21, 0
      %p55 = por %p53, %p54
      %p56 = scmp.ne.s32.totalorder %s45, %s48
      %p57 = scmp.eq.s32.totalorder %s26, 3
      %p58 = por %p56, %p57
      %p59 = scmp.ne.s32.totalorder %s48, %s49
      %p60 = scmp.eq.s32.totalorder %s26, 0
      %p61 = por %p59, %p60
      %p62 = scmp.ne.s32.totalorder %s48, %s49
      %p63 = scmp.eq.s32.totalorder %s27, 3
      %p64 = por %p62, %p63
      %p66 = scmp.ne.s32.totalorder %s49, %s65
      %p67 = scmp.eq.s32.totalorder %s27, 0
      %p68 = por %p66, %p67
      %s69 = ssub.s32 %s28, %s40
      %s70 = ssub.s32 %s29, %s36
      %s71 = sor.u32 %s69, %s70
      %p72 = scmp.eq.s32.totalorder %s71, 0
      %s74 = sadd.s32 %s73, 1
      %s75 = scalar_select %p72, %s73, %s74
      %p78 = pneg %p72
      %p79 = scmp.eq.s32.totalorder %s21, 3
      %p80 = por %p78, %p79
      %p81 = scmp.ne.s32.totalorder %s73, %s76
      %p82 = scmp.eq.s32.totalorder %s21, 0
      %p83 = por %p81, %p82
      %p84 = scmp.ne.s32.totalorder %s73, %s76
      %p85 = scmp.eq.s32.totalorder %s26, 3
      %p86 = por %p84, %p85
      %p87 = scmp.ne.s32.totalorder %s76, %s77
      %p88 = scmp.eq.s32.totalorder %s26, 0
      %p89 = por %p87, %p88
      %p90 = scmp.ne.s32.totalorder %s76, %s77
      %p91 = scmp.eq.s32.totalorder %s27, 3
      %p92 = por %p90, %p91
      %p94 = scmp.ne.s32.totalorder %s77, %s93
      %p95 = scmp.eq.s32.totalorder %s27, 0
      %p96 = por %p94, %p95
      %s98 = sadd.s32 %s97, 1
      %p101 = scmp.eq.s32.totalorder %s21, 3
      %p102 = scmp.ne.s32.totalorder %s97, %s99
      %p103 = scmp.eq.s32.totalorder %s21, 0
      %p104 = por %p102, %p103
      %p105 = scmp.ne.s32.totalorder %s97, %s99
      %p106 = scmp.eq.s32.totalorder %s26, 3
      %p107 = por %p105, %p106
      %p108 = scmp.ne.s32.totalorder %s99, %s100
      %p109 = scmp.eq.s32.totalorder %s26, 0
      %p110 = por %p108, %p109
      %p111 = scmp.ne.s32.totalorder %s99, %s100
      %p112 = scmp.eq.s32.totalorder %s27, 3
      %p113 = por %p111, %p112
      %p115 = scmp.ne.s32.totalorder %s100, %s114
      %p116 = scmp.eq.s32.totalorder %s27, 0
      %p117 = por %p115, %p116
      %s119 = sadd.s32 %s118, 1
      %p122 = scmp.eq.s32.totalorder %s21, 3
      %p123 = scmp.ne.s32.totalorder %s118, %s120
      %p124 = scmp.eq.s32.totalorder %s21, 0
      %p125 = por %p123, %p124
      %p126 = scmp.ne.s32.totalorder %s118, %s120
      %p127 = scmp.eq.s32.totalorder %s26, 3
      %p128 = por %p126, %p127
      %p129 = scmp.ne.s32.totalorder %s120, %s121
      %p130 = scmp.eq.s32.totalorder %s26, 0
      %p131 = por %p129, %p130
      %p132 = scmp.ne.s32.totalorder %s120, %s121
      %p133 = scmp.eq.s32.totalorder %s27, 3
      %p134 = por %p132, %p133
      %p136 = scmp.ne.s32.totalorder %s121, %s135
      %p137 = scmp.eq.s32.totalorder %s27, 0
      %p138 = por %p136, %p137
      %s140 = sadd.s32 %s139, 1
      %p143 = scmp.eq.s32.totalorder %s21, 3
      %p144 = scmp.ne.s32.totalorder %s139, %s141
      %p145 = scmp.eq.s32.totalorder %s21, 0
      %p146 = por %p144, %p145
      %p147 = scmp.ne.s32.totalorder %s139, %s141
      %p148 = scmp.eq.s32.totalorder %s26, 3
      %p149 = por %p147, %p148
      %p150 = scmp.ne.s32.totalorder %s141, %s142
      %p151 = scmp.eq.s32.totalorder %s26, 0
      %p152 = por %p150, %p151
      %p153 = scmp.ne.s32.totalorder %s141, %s142
      %p154 = scmp.eq.s32.totalorder %s27, 3
      %p155 = por %p153, %p154
      %p157 = scmp.ne.s32.totalorder %s142, %s156
      %p158 = scmp.eq.s32.totalorder %s27, 0
      %p159 = por %p157, %p158
      %s161 = sadd.s32 %s160, 1
      %p164 = scmp.eq.s32.totalorder %s21, 3
      %p165 = scmp.ne.s32.totalorder %s160, %s162
      %p166 = scmp.eq.s32.totalorder %s21, 0
      %p167 = por %p165, %p166
      %p168 = scmp.ne.s32.totalorder %s160, %s162
      %p169 = scmp.eq.s32.totalorder %s26, 3
      %p170 = por %p168, %p169
      %p171 = scmp.ne.s32.totalorder %s162, %s163
      %p172 = scmp.eq.s32.totalorder %s26, 0
      %p173 = por %p171, %p172
      %p174 = scmp.ne.s32.totalorder %s162, %s163
      %p175 = scmp.eq.s32.totalorder %s27, 3
      %p176 = por %p174, %p175
      %p178 = scmp.ne.s32.totalorder %s163, %s177
      %p179 = scmp.eq.s32.totalorder %s27, 0
      %p180 = por %p178, %p179
      %s181 = ssub.s32 %s28, %s40
      %p182 = scmp.eq.s32.totalorder %s181, 0
      %s184 = sadd.s32 %s183, 1
      %s185 = scalar_select %p182, %s183, %s184
      %p188 = pneg %p182
      %p189 = scmp.eq.s32.totalorder %s21, 3
      %p190 = por %p188, %p189
      %p191 = scmp.ne.s32.totalorder %s183, %s186
      %p192 = scmp.eq.s32.totalorder %s21, 0
      %p193 = por %p191, %p192
      %p194 = scmp.ne.s32.totalorder %s183, %s186
      %p195 = scmp.eq.s32.totalorder %s26, 3
      %p196 = por %p194, %p195
      %p197 = scmp.ne.s32.totalorder %s186, %s187
      %p198 = scmp.eq.s32.totalorder %s26, 0
      %p199 = por %p197, %p198
      %p200 = scmp.ne.s32.totalorder %s186, %s187
      %p201 = scmp.eq.s32.totalorder %s27, 3
      %p202 = por %p200, %p201
      %p204 = scmp.ne.s32.totalorder %s187, %s203
      %p205 = scmp.eq.s32.totalorder %s27, 0
      %p206 = por %p204, %p205
      %p207 = scmp.le.s32.totalorder 1, %s21
      %p208 = scmp.lt.s32.totalorder %s21, 5
      %p209 = pnand %p207, %p208
      %p210 = pneg %p209
      // Predicated region
      $region9: #{_combined_forward.1} parent=5 // pred_check
        _
      $region10: #{_combined_forward.1} parent=5 // pred_check_branch
        %212 = sbr.rel (%p209) target = $region12
      $region11: #{_combined_forward.1} parent=5 // pred_region
        %s213 = ssub.s32 %s21, 1
        // Predicated region
        $region13: #{_combined_forward.1} parent=11 // pred_check
          %p214 = pneg %p110
        $region14: #{_combined_forward.1} parent=11 // pred_check_branch
          %216 = sbr.rel (%p214) target = $region16
        $region15: #{_combined_forward.1} parent=11 // pred_region
          _
        $region16: #{_combined_forward.1} parent=11 // pred_fallthru
          _
        // Predicated region
        $region17: #{_combined_forward.1} parent=11 // pred_check
          %p217 = pneg %p131
        $region18: #{_combined_forward.1} parent=11 // pred_check_branch
          %219 = sbr.rel (%p217) target = $region20
        $region19: #{_combined_forward.1} parent=11 // pred_region
          _
        $region20: #{_combined_forward.1} parent=11 // pred_fallthru
          _
        // Predicated region
        $region21: #{_combined_forward.1} parent=11 // pred_check
          %p220 = pneg %p152
        $region22: #{_combined_forward.1} parent=11 // pred_check_branch
          %222 = sbr.rel (%p220) target = $region24
        $region23: #{_combined_forward.1} parent=11 // pred_region
          %s224 = ssub.s32 256, 256
          %225 = vsyncadd [#allocation8], %s224
          %s226 = sshll.u32 [#allocation9], 4
          %s227 = int_to_ptr.vmem [resolvable:$true] %s226
          %232 = dma.hbm_to_vmem [thread:$0]  %s4, 256, %s227, [#allocation8], 128, 128, 8
        $region24: #{_combined_forward.1} parent=11 // pred_fallthru
          _
        // Predicated region
        $region25: #{_combined_forward.1} parent=11 // pred_check
          %p233 = pneg %p173
        $region26: #{_combined_forward.1} parent=11 // pred_check_branch
          %235 = sbr.rel (%p233) target = $region28
        $region27: #{_combined_forward.1} parent=11 // pred_region
          _
        $region28: #{_combined_forward.1} parent=11 // pred_fallthru
          _
      $region12: #{_combined_forward.1} parent=5 // pred_fallthru
        _
      %p236 = scmp.lt.s32.totalorder %s21, 4
      // Predicated region
      $region29: #{_combined_forward.1} parent=5 // pred_check
        %p237 = pneg %p236
      $region30: #{_combined_forward.1} parent=5 // pred_check_branch
        %239 = sbr.rel (%p237) target = $region32
      $region31: #{_combined_forward.1} parent=5 // pred_region
        // Predicated region
        $region33: #{_combined_forward.1} parent=31 // pred_check
          %p240 = pneg %p55
        $region34: #{_combined_forward.1} parent=31 // pred_check_branch
          %242 = sbr.rel (%p240) target = $region36
        $region35: #{_combined_forward.1} parent=31 // pred_region
          %s243 = sand.u32 %s45, 1
          %s244 = scalar_lea.sflag [#allocation5], %s243
          %s245 = sand.u32 %s45, 1
          %s246 = smul.addr %s245, 4
          %s247 = scalar_lea.vmem [#allocation4], %s246
          %s249 = ssub.s32 64, 64
          %250 = vsyncadd %s244, %s249
          %s251 = smul.addr %s28, 2
          %s252 = sadd.s32 %s29, %s251
          %s253 = smul.addr %s252, 64
          %s254 = scalar_lea.hbm %s0, %s253
          %s256 = sshll.u32 %s247, 4
          %s257 = int_to_ptr.vmem [resolvable:$true] %s256
          %259 = dma.hbm_to_vmem [thread:$0]  %s254, 64, %s257, %s244
        $region36: #{_combined_forward.1} parent=31 // pred_fallthru
          _
        // Predicated region
        $region37: #{_combined_forward.1} parent=31 // pred_check
          %p260 = pneg %p83
        $region38: #{_combined_forward.1} parent=31 // pred_check_branch
          %262 = sbr.rel (%p260) target = $region40
        $region39: #{_combined_forward.1} parent=31 // pred_region
          %s263 = sand.u32 %s21, 1
          %s264 = scalar_lea.sflag [#allocation8], %s263
          %s265 = sand.u32 %s73, 1
          %s266 = scalar_lea.vmem [#allocation7], %s265
          %s268 = ssub.s32 16, 16
          %269 = vsyncadd %s264, %s268
          %s270 = smul.addr %s28, 2
          %s271 = sadd.s32 %s29, %s270
          %s272 = smul.addr %s271, 16
          %s273 = scalar_lea.hbm %s1, %s272
          %s275 = sshll.u32 %s266, 4
          %s276 = int_to_ptr.vmem [resolvable:$true] %s275
          %278 = dma.hbm_to_vmem [thread:$0]  %s273, 16, %s276, %s264
        $region40: #{_combined_forward.1} parent=31 // pred_fallthru
          _
      $region32: #{_combined_forward.1} parent=5 // pred_fallthru
        _
      %p279 = scmp.le.s32.totalorder 1, %s21
      %p280 = scmp.lt.s32.totalorder %s21, 5
      %p281 = pnand %p279, %p280
      %p282 = pneg %p281
      // Predicated region
      $region41: #{_combined_forward.1} parent=5 // pred_check
        _
      $region42: #{_combined_forward.1} parent=5 // pred_check_branch
        %284 = sbr.rel (%p281) target = $region44
      $region43: #{_combined_forward.1} parent=5 // pred_region
        %s285 = ssub.s32 %s21, 1
        %s286 = sand.u32 %s48, 1
        %s287 = scalar_lea.sflag [#allocation5], %s286
        %s288 = sand.u32 %s48, 1
        %s289 = smul.addr %s288, 4
        %s290 = scalar_lea.vmem [#allocation4], %s289
        // Predicated region
        $region45: #{_combined_forward.1} parent=43 // pred_check
          %p291 = pneg %p61
        $region46: #{_combined_forward.1} parent=43 // pred_check_branch
          %293 = sbr.rel (%p291) target = $region48
        $region47: #{_combined_forward.1} parent=43 // pred_region
          %294 = dma.done %s287, 64
        $region48: #{_combined_forward.1} parent=43 // pred_fallthru
          _
        %s295 = sand.u32 %s26, 1
        %s296 = scalar_lea.sflag [#allocation8], %s295
        %s297 = sand.u32 %s76, 1
        %s298 = scalar_lea.vmem [#allocation7], %s297
        // Predicated region
        $region49: #{_combined_forward.1} parent=43 // pred_check
          %p299 = pneg %p89
        $region50: #{_combined_forward.1} parent=43 // pred_check_branch
          %301 = sbr.rel (%p299) target = $region52
        $region51: #{_combined_forward.1} parent=43 // pred_region
          %302 = dma.done %s296, 16
        $region52: #{_combined_forward.1} parent=43 // pred_fallthru
          _
        // Predicated region
        $region53: #{_combined_forward.1} parent=43 // pred_check
          %p303 = pneg %p152
        $region54: #{_combined_forward.1} parent=43 // pred_check_branch
          %305 = sbr.rel (%p303) target = $region56
        $region55: #{_combined_forward.1} parent=43 // pred_region
          %306 = dma.done [#allocation8], 256
        $region56: #{_combined_forward.1} parent=43 // pred_fallthru
          _
        %s307 = sand.u32 %s48, 1
        %s308 = scalar_lea.sflag [#allocation5], %s307
        %s309 = sand.u32 %s48, 1
        %s310 = smul.addr %s309, 4
        %s311 = scalar_lea.vmem [#allocation4], %s310
        %p312 = pneg %p61
        %p313 = pneg %p58
        %s314 = sand.u32 %s26, 1
        %s315 = scalar_lea.sflag [#allocation8], %s314
        %s316 = sand.u32 %s76, 1
        %s317 = scalar_lea.vmem [#allocation7], %s316
        %p318 = pneg %p89
        %p319 = pneg %p86
        %p320 = pneg %p110
        %p321 = pneg %p107
        %p322 = pneg %p131
        %p323 = pneg %p128
        %p324 = pneg %p152
        %p325 = pneg %p149
        %p326 = pneg %p173
        %p327 = pneg %p170
        %p328 = pneg %p199
        %p329 = pneg %p196
        %s330 = sand.u32 %s186, 1
        %s331 = scalar_lea.sflag [#allocation6], %s330
        %s332 = sand.u32 %s186, 1
        %s333 = scalar_lea.vmem [#allocation10], %s332
        %p334 = scmp.eq.s32.totalorder %s31, 0
        // Predicated region
        $region57: #{_combined_forward.1} parent=43 // pred_check
          %p335 = pneg %p334
        $region58: #{_combined_forward.1} parent=43 // pred_check_branch
          %337 = sbr.rel (%p335) target = $region60
        $region59: #{_combined_forward.1} parent=43 // pred_region
          %vm338 = vcmask 24576
          %339 = vst.msk [vmem:[#allocation2] sm:$0x1] %vm338, 0.0
          %vm340 = vcmask 0
          %341 = vst.msk [vmem:[#allocation3] sm:$0x1] %vm340, 0.0
        $region60: #{_combined_forward.1} parent=43 // pred_fallthru
          _
        %v342 = vld [vmem:[%s290] sm:$0xf]
        %v343 = vld [vmem:[%s298] sm:$0x1]
        %v345 = vlaneseq
        %v346 = vshrl.u32 %v345, 7
        %v347 = vsub.s32 0, %v346
        %v348 = vrot.slane %v343, %v347
        %v350 = vmul.f32 %v342, %v348
        %v351 = vld [vmem:[#allocation2] sm:$0x1]
        %vm352 = vcmask 1043456
        %v353 = vsel %vm352, %v350, 0.0
        %354 = vadd.xlane.f32.xlu0 %v353
        %v355 = vpop.xlane.xlu0 %354
        %v357 = vlaneseq
        %v358 = vshrl.u32 %v357, 7
        %v359 = vsub.s32 0, %v358
        %v360 = vrot.slane %v355, %v359
        %v361 = vlaneseq
        %v362 = vshrl.u32 %v361, 7
        %v363 = vsub.s32 1, %v362
        %v364 = vrot.slane %v355, %v363
        %v365 = vlaneseq
        %v366 = vshrl.u32 %v365, 7
        %v367 = vsub.s32 2, %v366
        %v368 = vrot.slane %v355, %v367
        %v369 = vlaneseq
        %v370 = vshrl.u32 %v369, 7
        %v371 = vsub.s32 3, %v370
        %v372 = vrot.slane %v355, %v371
        %v373 = vcombine.low %v360, %v364
        %v374 = vcombine.low %v368, %v372
        %v376 = vunpack.c.l.s4 1966171168
        %v377 = vunpack.c.0.s8 %v376
        %v378 = vlaneseq
        %v379 = vshrl.u32 %v378, 7
        %v380 = vsub.s32 %v377, %v379
        %v381 = vrot.slane %v373, %v380
        %v383 = vunpack.c.l.s4 1966171168
        %v384 = vunpack.c.0.s8 %v383
        %v385 = vlaneseq
        %v386 = vshrl.u32 %v385, 7
        %v387 = vsub.s32 %v384, %v386
        %v388 = vrot.slane %v374, %v387
        %v389 = vcombine.low %v381, %v388
        %v391 = vunpack.c.l.s4 1966171168
        %v392 = vunpack.c.0.s8 %v391
        %v393 = vlaneseq
        %v394 = vshrl.u32 %v393, 7
        %v395 = vsub.s32 %v392, %v394
        %v396 = vrot.slane %v389, %v395
        %397 = vset.pattern.permute.xlu0 0
        %398 = vperm.xlu0 %397, %v396
        %v399 = vpop.permute.xlu0 %398
        %v400 = vlaneseq
        %v401 = vand.u32 %v400, 127
        %v402 = vlaneseq
        %v403 = vshrl.u32 %v402, 7
        %v404 = vsub.s32 %v401, %v403
        %v405 = vrot.slane %v399, %v404
        %v407 = vunpack.c.l.s4 1966171168
        %v408 = vunpack.c.0.s8 %v407
        %v409 = vlaneseq
        %v410 = vshrl.u32 %v409, 7
        %v411 = vsub.s32 %v408, %v410
        %v412 = vrot.slane %v405, %v411
        %v414 = vunpack.c.l.s4 1966171168
        %v415 = vunpack.c.0.s8 %v414
        %v416 = vlaneseq
        %v417 = vshrl.u32 %v416, 7
        %v418 = vsub.s32 %v415, %v417
        %v419 = vrot.slane %v412, %v418
        %v421 = vadd.f32 %v351, %v419
        %vm422 = vcmask 24576
        %423 = vst.msk [vmem:[#allocation2] sm:$0x1] %vm422, %v421
        %v424 = vld [vmem:[#allocation3] sm:$0x1]
        %vm425 = vcmask 1040384
        %v426 = vsel %vm425, %v343, 0.0
        %427 = vadd.xlane.f32.xlu0 %v426
        %v428 = vpop.xlane.xlu0 %427
        %v429 = vadd.f32 %v424, %v428
        %vm430 = vcmask 0
        %431 = vst.msk [vmem:[#allocation3] sm:$0x1] %vm430, %v429
        %p432 = scmp.eq.s32.totalorder %s31, 1
        // Predicated region
        $region61: #{_combined_forward.1} parent=43 // pred_check
          %p433 = pneg %p432
        $region62: #{_combined_forward.1} parent=43 // pred_check_branch
          %435 = sbr.rel (%p433) target = $region64
        $region63: #{_combined_forward.1} parent=43 // pred_region
          %v436 = vld [vmem:[#allocation2] sm:$0x1]
          %v437 = vld [vmem:[#allocation3] sm:$0x1]
          %v438 = vadd.f32 %v437, 1e-06
          %440 = vset.pattern.permute.xlu0 0
          %441 = vperm.xlu0 %440, %v438
          %v442 = vpop.permute.xlu0 %441
          %v444 = vlaneseq
          %v445 = vshrl.u32 %v444, 7
          %v446 = vsub.s32 0, %v445
          %v447 = vrot.slane %v442, %v446
          %v448 = vrcp.pop %v447
          %v449 = vmul.f32 %v436, %v448
          %v450 = vld [vmem:[%s2] sm:$0xf]
          %v451 = vld [vmem:[%s3] sm:$0x1]
          %vm452 = vcmask 31744
          %v454 = vsel %vm452, %v449, 0
          %v457 = vsel %vm352, %v450, 0
          %459 = vmatprep.subr.mxu0 0.0
          %460 = vmatpush1.msra.mxu0 %v457
          %461 = vmatprep.subr.mxu0 0.0
          %462 = vmatpush1.msra.mxu0 0.0
          %463 = vmatprep.subr.mxu0 0.0
          %464 = vmatpush1.msra.mxu0 0.0
          %465 = vmatprep.subr.mxu0 0.0
          %466 = vmatpush1.msra.mxu0 0.0
          %467 = vmatprep.subr.mxu0 0.0
          %468 = vmatpush1.msra.mxu0 0.0
          %469 = vmatprep.subr.mxu0 0.0
          %470 = vmatpush1.msra.mxu0 0.0
          %471 = vmatprep.subr.mxu0 0.0
          %472 = vmatpush1.msra.mxu0 0.0
          %473 = vmatprep.subr.mxu0 0.0
          %474 = vmatpush1.msra.mxu0 0.0
          %475 = vmatprep.subr.mxu0 0.0
          %476 = vmatpush1.msra.mxu0 0.0
          %477 = vmatprep.subr.mxu0 0.0
          %478 = vmatpush1.msra.mxu0 0.0
          %479 = vmatprep.subr.mxu0 0.0
          %480 = vmatpush1.msra.mxu0 0.0
          %481 = vmatprep.subr.mxu0 0.0
          %482 = vmatpush1.msra.mxu0 0.0
          %483 = vmatprep.subr.mxu0 0.0
          %484 = vmatpush1.msra.mxu0 0.0
          %485 = vmatprep.subr.mxu0 0.0
          %486 = vmatpush1.msra.mxu0 0.0
          %487 = vmatprep.subr.mxu0 0.0
          %488 = vmatpush1.msra.mxu0 0.0
          %489 = vmatprep.subr.mxu0 0.0
          %490 = vmatpush1.msra.mxu0 0.0
          %491 = vmatprep.subr.mxu0 0.0
          %492 = vmatpush1.msra.mxu0 0.0
          %493 = vmatprep.subr.mxu0 0.0
          %494 = vmatpush1.msra.mxu0 0.0
          %495 = vmatprep.subr.mxu0 0.0
          %496 = vmatpush1.msra.mxu0 0.0
          %497 = vmatprep.subr.mxu0 0.0
          %498 = vmatpush1.msra.mxu0 0.0
          %499 = vmatprep.subr.mxu0 0.0
          %500 = vmatpush1.msra.mxu0 0.0
          %501 = vmatprep.subr.mxu0 0.0
          %502 = vmatpush1.msra.mxu0 0.0
          %503 = vmatprep.subr.mxu0 0.0
          %504 = vmatpush1.msra.mxu0 0.0
          %505 = vmatprep.subr.mxu0 0.0
          %506 = vmatpush1.msra.mxu0 0.0
          %507 = vmatprep.subr.mxu0 0.0
          %508 = vmatpush1.msra.mxu0 0.0
          %509 = vmatprep.subr.mxu0 0.0
          %510 = vmatpush1.msra.mxu0 0.0
          %511 = vmatprep.subr.mxu0 0.0
          %512 = vmatpush1.msra.mxu0 0.0
          %513 = vmatprep.subr.mxu0 0.0
          %514 = vmatpush1.msra.mxu0 0.0
          %515 = vmatprep.subr.mxu0 0.0
          %516 = vmatpush1.msra.mxu0 0.0
          %517 = vmatprep.subr.mxu0 0.0
          %518 = vmatpush1.msra.mxu0 0.0
          %519 = vmatprep.subr.mxu0 0.0
          %520 = vmatpush1.msra.mxu0 0.0
          %521 = vmatprep.subr.mxu0 0.0
          %522 = vmatpush1.msra.mxu0 0.0
          %523 = vmatprep.mubr.f32.mxu0 0.0
          %524 = vmatmul.mubr.f32.gmra.mrb[0].mxu0 %v454
          %v525 = vpop.f32.mrb[0].mxu0
          %v526 = vadd.f32 %v451, %v525
          %v527 = vpop.f32.mrb[0].mxu0
          %528 = vdwg.mxu0
          %v529 = vtanh.pop %v526
          %v530 = vld [vmem:[#allocation9] sm:$0xff]
          %v531 = vld [vmem:[#allocation9 + $0x8] sm:$0xf]
          %v532 = vld [vmem:[%s5] sm:$0x1]
          %vm533 = vcmask 97280
          %v535 = vsel %vm533, %v529, 0
          %v538 = vsel %vm352, %v531, 0
          %540 = vmatprep.subr.mxu0 0.0
          %541 = vmatpush1.msra.mxu0 %v530
          %542 = vmatprep.subr.mxu0 0.0
          %543 = vmatpush1.msra.mxu0 %v538
          %544 = vmatprep.subr.mxu0 0.0
          %545 = vmatpush1.msra.mxu0 0.0
          %546 = vmatprep.subr.mxu0 0.0
          %547 = vmatpush1.msra.mxu0 0.0
          %548 = vmatprep.subr.mxu0 0.0
          %549 = vmatpush1.msra.mxu0 0.0
          %550 = vmatprep.subr.mxu0 0.0
          %551 = vmatpush1.msra.mxu0 0.0
          %552 = vmatprep.subr.mxu0 0.0
          %553 = vmatpush1.msra.mxu0 0.0
          %554 = vmatprep.subr.mxu0 0.0
          %555 = vmatpush1.msra.mxu0 0.0
          %556 = vmatprep.subr.mxu0 0.0
          %557 = vmatpush1.msra.mxu0 0.0
          %558 = vmatprep.subr.mxu0 0.0
          %559 = vmatpush1.msra.mxu0 0.0
          %560 = vmatprep.subr.mxu0 0.0
          %561 = vmatpush1.msra.mxu0 0.0
          %562 = vmatprep.subr.mxu0 0.0
          %563 = vmatpush1.msra.mxu0 0.0
          %564 = vmatprep.subr.mxu0 0.0
          %565 = vmatpush1.msra.mxu0 0.0
          %566 = vmatprep.subr.mxu0 0.0
          %567 = vmatpush1.msra.mxu0 0.0
          %568 = vmatprep.subr.mxu0 0.0
          %569 = vmatpush1.msra.mxu0 0.0
          %570 = vmatprep.subr.mxu0 0.0
          %571 = vmatpush1.msra.mxu0 0.0
          %572 = vmatprep.subr.mxu0 0.0
          %573 = vmatpush1.msra.mxu0 0.0
          %574 = vmatprep.subr.mxu0 0.0
          %575 = vmatpush1.msra.mxu0 0.0
          %576 = vmatprep.subr.mxu0 0.0
          %577 = vmatpush1.msra.mxu0 0.0
          %578 = vmatprep.subr.mxu0 0.0
          %579 = vmatpush1.msra.mxu0 0.0
          %580 = vmatprep.subr.mxu0 0.0
          %581 = vmatpush1.msra.mxu0 0.0
          %582 = vmatprep.subr.mxu0 0.0
          %583 = vmatpush1.msra.mxu0 0.0
          %584 = vmatprep.subr.mxu0 0.0
          %585 = vmatpush1.msra.mxu0 0.0
          %586 = vmatprep.subr.mxu0 0.0
          %587 = vmatpush1.msra.mxu0 0.0
          %588 = vmatprep.subr.mxu0 0.0
          %589 = vmatpush1.msra.mxu0 0.0
          %590 = vmatprep.subr.mxu0 0.0
          %591 = vmatpush1.msra.mxu0 0.0
          %592 = vmatprep.subr.mxu0 0.0
          %593 = vmatpush1.msra.mxu0 0.0
          %594 = vmatprep.subr.mxu0 0.0
          %595 = vmatpush1.msra.mxu0 0.0
          %596 = vmatprep.subr.mxu0 0.0
          %597 = vmatpush1.msra.mxu0 0.0
          %598 = vmatprep.subr.mxu0 0.0
          %599 = vmatpush1.msra.mxu0 0.0
          %600 = vmatprep.subr.mxu0 0.0
          %601 = vmatpush1.msra.mxu0 0.0
          %602 = vmatprep.subr.mxu0 0.0
          %603 = vmatpush1.msra.mxu0 0.0
          %604 = vmatprep.mubr.f32.mxu0 0.0
          %605 = vmatmul.mubr.f32.gmra.mrb[0].mxu0 %v535
          %v606 = vpop.f32.mrb[0].mxu0
          %v607 = vadd.f32 %v532, %v606
          %v608 = vpop.f32.mrb[0].mxu0
          %609 = vdwg.mxu0
          %610 = vst [vmem:[%s333] sm:$0x1] %v607
        $region64: #{_combined_forward.1} parent=43 // pred_fallthru
          _
        %s611 = sand.u32 %s186, 1
        %s612 = scalar_lea.sflag [#allocation6], %s611
        %s613 = sand.u32 %s186, 1
        %s614 = scalar_lea.vmem [#allocation10], %s613
        // Predicated region
        $region65: #{_combined_forward.1} parent=43 // pred_check
          %p615 = pneg %p196
        $region66: #{_combined_forward.1} parent=43 // pred_check_branch
          %617 = sbr.rel (%p615) target = $region68
        $region67: #{_combined_forward.1} parent=43 // pred_region
          %s619 = ssub.s32 16, 16
          %620 = vsyncadd %s612, %s619
          %s621 = smul.addr %s30, 16
          %s622 = scalar_lea.hbm %s6, %s621
          %s624 = sshll.u32 %s614, 4
          %s625 = int_to_ptr.vmem [resolvable:$true] %s624
          %627 = dma.vmem_to_hbm [thread:$0]  %s625, 16, %s622, %s612
        $region68: #{_combined_forward.1} parent=43 // pred_fallthru
          _
      $region44: #{_combined_forward.1} parent=5 // pred_fallthru
        _
      %p628 = scmp.le.s32.totalorder 2, %s21
      // Predicated region
      $region69: #{_combined_forward.1} parent=5 // pred_check
        %p629 = pneg %p628
      $region70: #{_combined_forward.1} parent=5 // pred_check_branch
        %631 = sbr.rel (%p629) target = $region72
      $region71: #{_combined_forward.1} parent=5 // pred_region
        %s632 = ssub.s32 %s21, 2
        // Predicated region
        $region73: #{_combined_forward.1} parent=71 // pred_check
          %p633 = pneg %p202
        $region74: #{_combined_forward.1} parent=71 // pred_check_branch
          %635 = sbr.rel (%p633) target = $region76
        $region75: #{_combined_forward.1} parent=71 // pred_region
          %s636 = sand.u32 %s187, 1
          %s637 = scalar_lea.sflag [#allocation6], %s636
          %s638 = sand.u32 %s187, 1
          %s639 = scalar_lea.vmem [#allocation10], %s638
          %640 = dma.done %s637, 16
        $region76: #{_combined_forward.1} parent=71 // pred_fallthru
          _
      $region72: #{_combined_forward.1} parent=5 // pred_fallthru
        _
    $region6: #{_combined_forward.1} parent=1 // loop_footer
      %s25 = sadd.s32 1, %s21
    $region7: #{_combined_forward.1} parent=1 // loop_footer_branch
      %20 = sbr.rel target = $region3
    $region8: #{_combined_forward.1} parent=1 // loop_exit
      _
    %641 = vsyncpa [#allocation5], 1
    %s642 = scalar_lea.sflag [#allocation5], 1
    %643 = vsyncpa %s642, 1
    %644 = vsyncpa [#allocation8], 1
    %s645 = scalar_lea.sflag [#allocation8], 1
    %646 = vsyncpa %s645, 1
    %647 = vsyncpa [#allocation6], 1
    %s648 = scalar_lea.sflag [#allocation6], 1
    %649 = vsyncpa %s648, 1

</llo_original>
